<compile_context>
chip_gen: v6e
topology: v6e:2x2x1
jax: 0.10.0
libtpu: 0.0.40
codegen_flags: <defaults>
</compile_context>

<pallas_src>
import jax
import jax.numpy as jnp
from jax.experimental import pallas as pl
from jax.experimental.pallas import tpu as pltpu

# Tile targets (v6e/v7x defaults; per-step VMEM stays ~8 MiB, under the default
# scoped limit on all generations).  On v5e, 128/256/256 is also fine.
_TM, _TK, _TC = 256, 512, 512


def _round_up(x, m):
    return ((x + m - 1) // m) * m


def _pad_and_tile(n, align, tile_target):
    """Return (padded_dim, tile) with tile | padded_dim and tile (8,128)-legal."""
    p = _round_up(max(n, align), align)
    if p <= tile_target:
        return p, p
    return _round_up(p, tile_target), tile_target


# ----------------------------------------------------------------- kernels ---

def _bound_pair_kernel(w_ref, ru_ref, rl_ref, ou_ref, ol_ref, s_acc, d_acc):
    """ou = W_pos@Ru + W_neg@Rl (+bias), ol = W_pos@Rl + W_neg@Ru (+bias).

    Sum/diff identity (w_pos = (W+|W|)/2, w_neg = (W-|W|)/2):
        S = W@(Ru+Rl), D = |W|@(Ru-Rl)  ->  ou = (S+D)/2, ol = (S-D)/2
    so only 2 MXU matmuls per K tile. Bias is already folded into the
    augmented K row/column of the operands (see _pad_lhs / _pad_rhs).
    """
    k = pl.program_id(2)

    @pl.when(k == 0)
    def _init():
        s_acc[...] = jnp.zeros_like(s_acc)
        d_acc[...] = jnp.zeros_like(d_acc)

    w = w_ref[...]
    ru = ru_ref[...]
    rl = rl_ref[...]
    s_acc[...] += jnp.dot(w, ru + rl, preferred_element_type=jnp.float32)
    d_acc[...] += jnp.dot(jnp.abs(w), ru - rl, preferred_element_type=jnp.float32)

    @pl.when(k == pl.num_programs(2) - 1)
    def _finalize():
        s = s_acc[...]
        d = d_acc[...]
        ou_ref[...] = (0.5 * (s + d)).astype(ou_ref.dtype)
        ol_ref[...] = (0.5 * (s - d)).astype(ol_ref.dtype)


def _bound_one_kernel(w_ref, a_ref, b_ref, o_ref, acc):
    """o = W_pos@A + W_neg@B (+bias) = 0.5*(W@(A+B) + |W|@(A-B))."""
    k = pl.program_id(2)

    @pl.when(k == 0)
    def _init():
        acc[...] = jnp.zeros_like(acc)

    w = w_ref[...]
    a = a_ref[...]
    b = b_ref[...]
    acc[...] += 0.5 * (
        jnp.dot(w, a + b, preferred_element_type=jnp.float32)
        + jnp.dot(jnp.abs(w), a - b, preferred_element_type=jnp.float32))

    @pl.when(k == pl.num_programs(2) - 1)
    def _finalize():
        o_ref[...] = acc[...].astype(o_ref.dtype)


# ----------------------------------------------------------- pallas drivers ---

def _pallas_bound_pair(Wp, Rup, Rlp, tm, tk, tc):
    M, K = Wp.shape
    Cp = Rup.shape[1]
    grid = (M // tm, Cp // tc, K // tk)
    cost = pl.CostEstimate(
        flops=2 * 2 * M * K * Cp,          # 2 matmuls (sum/diff trick)
        transcendentals=0,
        bytes_accessed=4 * (M * K + 2 * K * Cp + 2 * M * Cp))
    return pl.pallas_call(
        _bound_pair_kernel,
        out_shape=(jax.ShapeDtypeStruct((M, Cp), jnp.float32),
                   jax.ShapeDtypeStruct((M, Cp), jnp.float32)),
        grid_spec=pltpu.PrefetchScalarGridSpec(
            num_scalar_prefetch=0,
            grid=grid,
            in_specs=[
                pl.BlockSpec((tm, tk), lambda i, j, k: (i, k)),
                pl.BlockSpec((tk, tc), lambda i, j, k: (k, j)),
                pl.BlockSpec((tk, tc), lambda i, j, k: (k, j)),
            ],
            out_specs=[
                pl.BlockSpec((tm, tc), lambda i, j, k: (i, j)),
                pl.BlockSpec((tm, tc), lambda i, j, k: (i, j)),
            ],
            scratch_shapes=[pltpu.VMEM((tm, tc), jnp.float32),
                            pltpu.VMEM((tm, tc), jnp.float32)],
        ),
        compiler_params=pltpu.CompilerParams(
            dimension_semantics=("parallel", "parallel", "arbitrary")),
        cost_estimate=cost,
    )(Wp, Rup, Rlp)


def _pallas_bound_one(Wp, Ap, Bp, tm, tk, tc):
    M, K = Wp.shape
    Cp = Ap.shape[1]
    grid = (M // tm, Cp // tc, K // tk)
    cost = pl.CostEstimate(
        flops=2 * 2 * M * K * Cp,
        transcendentals=0,
        bytes_accessed=4 * (M * K + 2 * K * Cp + M * Cp))
    return pl.pallas_call(
        _bound_one_kernel,
        out_shape=jax.ShapeDtypeStruct((M, Cp), jnp.float32),
        grid_spec=pltpu.PrefetchScalarGridSpec(
            num_scalar_prefetch=0,
            grid=grid,
            in_specs=[
                pl.BlockSpec((tm, tk), lambda i, j, k: (i, k)),
                pl.BlockSpec((tk, tc), lambda i, j, k: (k, j)),
                pl.BlockSpec((tk, tc), lambda i, j, k: (k, j)),
            ],
            out_specs=pl.BlockSpec((tm, tc), lambda i, j, k: (i, j)),
            scratch_shapes=[pltpu.VMEM((tm, tc), jnp.float32)],
        ),
        compiler_params=pltpu.CompilerParams(
            dimension_semantics=("parallel", "parallel", "arbitrary")),
        cost_estimate=cost,
    )(Wp, Ap, Bp)


# ---------------------------------------------------- packing / padding glue ---

def _pad_lhs(W, b, M, K):
    """Pad W to (M, K) and put the bias b in the augmentation column n_in."""
    n_out, n_in = W.shape
    Wp = jnp.zeros((M, K), jnp.float32)
    Wp = Wp.at[:n_out, :n_in].set(W.astype(jnp.float32))
    Wp = Wp.at[:n_out, n_in].set(b.astype(jnp.float32))
    return Wp


def _pad_rhs(R, bias_mask, n_in, K, Cp):
    """Pad packed RHS to (K, Cp) and put bias_mask in the augmentation row."""
    C = R.shape[1]
    Rp = jnp.zeros((K, Cp), jnp.float32)
    Rp = Rp.at[:n_in, :C].set(R.astype(jnp.float32))
    Rp = Rp.at[n_in, :C].set(bias_mask.astype(jnp.float32))
    return Rp


def _bias_cols_mask(n0):
    # bias applies to the b_* column (n0) and the bound column (n0 + 1) only
    return jnp.zeros((n0 + 2,), jnp.float32).at[n0].set(1.0).at[n0 + 1].set(1.0)


def bound_pair(W, b, Ru, Rl, bias_mask):
    """ou = W_pos@Ru + W_neg@Rl + b*mask, ol = W_pos@Rl + W_neg@Ru + b*mask."""
    W = jnp.asarray(W, jnp.float32)
    b = jnp.asarray(b, jnp.float32)
    n_out, n_in = W.shape
    C = Ru.shape[1]
    M, tm = _pad_and_tile(n_out, 8, _TM)
    K, tk = _pad_and_tile(n_in + 1, 128, _TK)
    Cp, tc = _pad_and_tile(C, 128, _TC)
    Wp = _pad_lhs(W, b, M, K)
    Rup = _pad_rhs(Ru, bias_mask, n_in, K, Cp)
    Rlp = _pad_rhs(Rl, bias_mask, n_in, K, Cp)
    ou, ol = _pallas_bound_pair(Wp, Rup, Rlp, tm, tk, tc)
    return ou[:n_out, :C], ol[:n_out, :C]


def bound_one(W, b, A, B, bias_mask):
    """out = W_pos@A + W_neg@B + b*mask (single-sided, for backsub)."""
    W = jnp.asarray(W, jnp.float32)
    b = jnp.asarray(b, jnp.float32)
    n_out, n_in = W.shape
    C = A.shape[1]
    M, tm = _pad_and_tile(n_out, 8, _TM)
    K, tk = _pad_and_tile(n_in + 1, 128, _TK)
    Cp, tc = _pad_and_tile(C, 128, _TC)
    Wp = _pad_lhs(W, b, M, K)
    Ap = _pad_rhs(A, bias_mask, n_in, K, Cp)
    Bp = _pad_rhs(B, bias_mask, n_in, K, Cp)
    out = _pallas_bound_one(Wp, Ap, Bp, tm, tk, tc)
    return out[:n_out, :C]


# ---------------------------------------------------- abstract layer "module" ---

def make_abstract_input(lb, ub):
    """Abstract input layer state (identity relaxation, concrete box bounds)."""
    lb = jnp.asarray(lb, jnp.float32)
    ub = jnp.asarray(ub, jnp.float32)
    d = lb.shape[0]
    eye = jnp.eye(d, dtype=jnp.float32)
    zero = jnp.zeros((d,), jnp.float32)
    return dict(
        W_upper=eye, W_lower=eye, b_upper=zero, b_lower=zero,
        W_upper2=eye, W_lower2=eye, b_upper2=zero, b_lower2=zero,
        ub=ub, lb=lb, prev=None)


def abstract_affine_forward(W, b, prev):
    """Pallas version of AbstractAffine.forward (numeric state updates)."""
    W = jnp.asarray(W, jnp.float32)
    b = jnp.asarray(b, jnp.float32)
    n0 = prev["W_upper"].shape[1]
    Pu = jnp.concatenate(
        [prev["W_upper"], prev["b_upper"][:, None], prev["ub"][:, None]], axis=1)
    Pl = jnp.concatenate(
        [prev["W_lower"], prev["b_lower"][:, None], prev["lb"][:, None]], axis=1)
    mask = _bias_cols_mask(n0)
    ou, ol = bound_pair(W, b, Pu, Pl, mask)
    return dict(
        W_upper=ou[:, :n0], b_upper=ou[:, n0], ub=ou[:, n0 + 1],
        W_lower=ol[:, :n0], b_lower=ol[:, n0], lb=ol[:, n0 + 1],
        W_upper2=W, W_lower2=W, b_upper2=b, b_lower2=b,
        prev=prev)


def backsub(layer):
    """Pallas version of AbstractLayer.backsub (static chain walked host-side)."""
    W_upper, W_lower = layer["W_upper2"], layer["W_lower2"]
    b_upper, b_lower = layer["b_upper2"], layer["b_lower2"]
    best_ub, best_lb = layer["ub"], layer["lb"]
    cur = layer
    while cur["prev"] is not None:
        prev = cur["prev"]
        n0 = prev["W_upper2"].shape[1]
        Pu = jnp.concatenate(
            [prev["W_upper2"], prev["b_upper2"][:, None], prev["ub"][:, None]], axis=1)
        Pl = jnp.concatenate(
            [prev["W_lower2"], prev["b_lower2"][:, None], prev["lb"][:, None]], axis=1)
        mask = _bias_cols_mask(n0)
        out_u = bound_one(W_upper, b_upper, Pu, Pl, mask)   # upper side
        out_l = bound_one(W_lower, b_lower, Pl, Pu, mask)   # lower side
        best_ub = jnp.minimum(best_ub, out_u[:, n0 + 1])
        best_lb = jnp.maximum(best_lb, out_l[:, n0 + 1])
        W_upper, b_upper = out_u[:, :n0], out_u[:, n0]
        W_lower, b_lower = out_l[:, :n0], out_l[:, n0]
        cur = prev
    # Final pass against the innermost layer's concrete bounds.
    mask1 = jnp.ones((1,), jnp.float32)
    ub_col = cur["ub"][:, None]
    lb_col = cur["lb"][:, None]
    ub_fin = bound_one(W_upper, b_upper, ub_col, lb_col, mask1)[:, 0]
    lb_fin = bound_one(W_lower, b_lower, lb_col, ub_col, mask1)[:, 0]
    best_ub = jnp.minimum(best_ub, ub_fin)
    best_lb = jnp.maximum(best_lb, lb_fin)
    return best_ub, best_lb


def _output_spec_matrix(n_classes, pred):
    M1 = -jnp.eye(n_classes, dtype=jnp.float32)
    M2 = jnp.zeros((n_classes, n_classes), jnp.float32).at[:, pred].set(1.0)
    Mm = M1 + M2
    return jnp.concatenate([Mm[:pred], Mm[pred + 1:]], axis=0)


def abstract_output_forward(W, b, pred, prev):
    """Pallas version of AbstractOutput.forward (affine transform + backsub)."""
    W = jnp.asarray(W, jnp.float32)
    b = jnp.asarray(b, jnp.float32)
    Mm = _output_spec_matrix(W.shape[0], pred)       # tiny spec matrix: plain JAX
    layer = abstract_affine_forward(Mm @ W, Mm @ b, prev)
    best_ub, best_lb = backsub(layer)
    layer["ub"] = best_ub
    layer["lb"] = best_lb
    return layer
# TODO(synk): when verifying many inputs/specs at once, batch several small
# layers into the packed C dimension of one call to fill the MXU (review item).


# ------------------------------------------------------ pure-JAX references ---

def _pos_neg(W):
    return jnp.where(W >= 0.0, W, 0.0), jnp.where(W >= 0.0, 0.0, W)


def abstract_affine_forward_ref(W, b, prev):
    W = jnp.asarray(W, jnp.float32)
    b = jnp.asarray(b, jnp.float32)
    wp, wn = _pos_neg(W)
    return dict(
        W_upper=wp @ prev["W_upper"] + wn @ prev["W_lower"],
        W_lower=wp @ prev["W_lower"] + wn @ prev["W_upper"],
        b_upper=wp @ prev["b_upper"] + wn @ prev["b_lower"] + b,
        b_lower=wp @ prev["b_lower"] + wn @ prev["b_upper"] + b,
        ub=wp @ prev["ub"] + wn @ prev["lb"] + b,
        lb=wp @ prev["lb"] + wn @ prev["ub"] + b,
        W_upper2=W, W_lower2=W, b_upper2=b, b_lower2=b,
        prev=prev)


def backsub_ref(layer):
    W_upper, W_lower = layer["W_upper2"], layer["W_lower2"]
    b_upper, b_lower = layer["b_upper2"], layer["b_lower2"]
    best_ub, best_lb = layer["ub"], layer["lb"]
    cur = layer
    while cur["prev"] is not None:
        prev = cur["prev"]
        up, un = _pos_neg(W_upper)
        lp, ln = _pos_neg(W_lower)
        ub = up @ prev["ub"] + un @ prev["lb"] + b_upper
        lb = lp @ prev["lb"] + ln @ prev["ub"] + b_lower
        best_ub = jnp.minimum(best_ub, ub)
        best_lb = jnp.maximum(best_lb, lb)
        b_upper = up @ prev["b_upper2"] + un @ prev["b_lower2"] + b_upper
        b_lower = lp @ prev["b_lower2"] + ln @ prev["b_upper2"] + b_lower
        W_upper = up @ prev["W_upper2"] + un @ prev["W_lower2"]
        W_lower = lp @ prev["W_lower2"] + ln @ prev["W_upper2"]
        cur = prev
    up, un = _pos_neg(W_upper)
    lp, ln = _pos_neg(W_lower)
    ub = up @ cur["ub"] + un @ cur["lb"] + b_upper
    lb = lp @ cur["lb"] + ln @ cur["ub"] + b_lower
    return jnp.minimum(best_ub, ub), jnp.maximum(best_lb, lb)


def abstract_output_forward_ref(W, b, pred, prev):
    W = jnp.asarray(W, jnp.float32)
    b = jnp.asarray(b, jnp.float32)
    Mm = _output_spec_matrix(W.shape[0], pred)
    layer = abstract_affine_forward_ref(Mm @ W, Mm @ b, prev)
    best_ub, best_lb = backsub_ref(layer)
    layer["ub"] = best_ub
    layer["lb"] = best_lb
    return layer


# -------------------------------------------------------------------- main ---

if __name__ == "__main__":
    d0, n_hidden, n_classes, pred = 16, 32, 10, 3

    key = jax.random.PRNGKey(0)
    k_x, k_w1, k_b1, k_w2, k_b2 = jax.random.split(key, 5)

    x0 = jax.random.normal(k_x, (d0,), jnp.float32)
    eps = 0.1
    input_lb, input_ub = x0 - eps, x0 + eps

    W1 = 0.3 * jax.random.normal(k_w1, (n_hidden, d0), jnp.float32)
    b1 = 0.1 * jax.random.normal(k_b1, (n_hidden,), jnp.float32)
    W2 = 0.3 * jax.random.normal(k_w2, (n_classes, n_hidden), jnp.float32)
    b2 = 0.1 * jax.random.normal(k_b2, (n_classes,), jnp.float32)

    # Pallas pipeline: abstract input -> hidden AbstractAffine -> AbstractOutput.
    inp = make_abstract_input(input_lb, input_ub)
    hidden = abstract_affine_forward(W1, b1, inp)
    out_layer = abstract_output_forward(W2, b2, pred, hidden)
    jax.block_until_ready((out_layer["ub"], out_layer["lb"],
                           out_layer["W_upper"], out_layer["W_lower"],
                           out_layer["b_upper"], out_layer["b_lower"]))

    # Pure-JAX reference mirroring the PyTorch module semantics.
    hidden_ref = abstract_affine_forward_ref(W1, b1, inp)
    out_ref = abstract_output_forward_ref(W2, b2, pred, hidden_ref)

    for name in ("W_upper", "W_lower", "b_upper", "b_lower", "ub", "lb"):
        assert jnp.allclose(hidden[name], hidden_ref[name],
                            rtol=1e-4, atol=1e-4), f"hidden mismatch: {name}"
        assert jnp.allclose(out_layer[name], out_ref[name],
                            rtol=1e-4, atol=1e-4), f"output mismatch: {name}"
    assert bool(jnp.all(out_layer["lb"] <= out_layer["ub"] + 1e-5)), "unsound bounds"

    print("KERNEL_OK")
</pallas_src>

<mosaic_0001>
module attributes {stable_mosaic.version = 11 : i64} {
  func.func @_bound_pair_kernel(%arg0: i32, %arg1: i32, %arg2: i32, %arg3: memref<32x128xf32, #tpu.memory_space<vmem>>, %arg4: memref<128x128xf32, #tpu.memory_space<vmem>>, %arg5: memref<128x128xf32, #tpu.memory_space<vmem>>, %arg6: memref<32x128xf32, #tpu.memory_space<vmem>>, %arg7: memref<32x128xf32, #tpu.memory_space<vmem>>, %arg8: memref<32x128xf32, #tpu.memory_space<vmem>>, %arg9: memref<32x128xf32, #tpu.memory_space<vmem>>) attributes {dimension_semantics = [#tpu.dimension_semantics<parallel>, #tpu.dimension_semantics<parallel>, #tpu.dimension_semantics<arbitrary>], iteration_bounds = array<i64: 1, 1, 1>, scalar_prefetch = 0 : i64, scratch_operands = 2 : i64, tpu.core_type = #tpu.core_type<tc>, window_params = [{transform_indices = @transform_0, window_bounds = array<i64: 32, 128>}, {transform_indices = @transform_1, window_bounds = array<i64: 128, 128>}, {transform_indices = @transform_2, window_bounds = array<i64: 128, 128>}, {transform_indices = @transform_3, window_bounds = array<i64: 32, 128>}, {transform_indices = @transform_4, window_bounds = array<i64: 32, 128>}]} {
    %c0_i32 = arith.constant 0 : i32
    %0 = arith.cmpi eq, %arg2, %c0_i32 : i32
    %1 = arith.extui %0 : i1 to i32
    %c0_i32_0 = arith.constant 0 : i32
    %2 = arith.cmpi ne, %1, %c0_i32_0 : i32
    scf.if %2 {
      %cst_17 = arith.constant 0.000000e+00 : f32
      %20 = vector.broadcast %cst_17 : f32 to vector<32x128xf32>
      %c0_18 = arith.constant 0 : index
      %c0_19 = arith.constant 0 : index
      %21 = vector.load %arg8[%c0_18, %c0_19] : memref<32x128xf32, #tpu.memory_space<vmem>>, vector<32x128xf32>
      tpu.vector_store %arg8[%c0_18, %c0_19], %20 {strides = array<i32>} : memref<32x128xf32, #tpu.memory_space<vmem>>, vector<32x128xf32>,
      %cst_20 = arith.constant 0.000000e+00 : f32
      %22 = vector.broadcast %cst_20 : f32 to vector<32x128xf32>
      %c0_21 = arith.constant 0 : index
      %c0_22 = arith.constant 0 : index
      %23 = vector.load %arg9[%c0_21, %c0_22] : memref<32x128xf32, #tpu.memory_space<vmem>>, vector<32x128xf32>
      tpu.vector_store %arg9[%c0_21, %c0_22], %22 {strides = array<i32>} : memref<32x128xf32, #tpu.memory_space<vmem>>, vector<32x128xf32>,
    } else {
    }
    %c0 = arith.constant 0 : index
    %c0_1 = arith.constant 0 : index
    %3 = vector.load %arg3[%c0, %c0_1] : memref<32x128xf32, #tpu.memory_space<vmem>>, vector<32x128xf32>
    %c0_2 = arith.constant 0 : index
    %c0_3 = arith.constant 0 : index
    %4 = vector.load %arg4[%c0_2, %c0_3] : memref<128x128xf32, #tpu.memory_space<vmem>>, vector<128x128xf32>
    %c0_4 = arith.constant 0 : index
    %c0_5 = arith.constant 0 : index
    %5 = vector.load %arg5[%c0_4, %c0_5] : memref<128x128xf32, #tpu.memory_space<vmem>>, vector<128x128xf32>
    %c0_6 = arith.constant 0 : index
    %c0_7 = arith.constant 0 : index
    %6 = vector.load %arg8[%c0_6, %c0_7] : memref<32x128xf32, #tpu.memory_space<vmem>>, vector<32x128xf32>
    %7 = arith.addf %4, %5 : vector<128x128xf32>
    %cst = arith.constant dense<0.000000e+00> : vector<32x128xf32>
    %8 = tpu.matmul %3, %7, %cst {dimension_numbers = #tpu.dot_dimension_numbers<[1], [0], [0], [1], [0, 0, 1, 1], [], []>} : vector<32x128xf32>, vector<128x128xf32>, vector<32x128xf32> -> vector<32x128xf32>
    %9 = arith.addf %6, %8 : vector<32x128xf32>
    %c0_8 = arith.constant 0 : index
    %c0_9 = arith.constant 0 : index
    %10 = vector.load %arg8[%c0_8, %c0_9] : memref<32x128xf32, #tpu.memory_space<vmem>>, vector<32x128xf32>
    tpu.vector_store %arg8[%c0_8, %c0_9], %9 {strides = array<i32>} : memref<32x128xf32, #tpu.memory_space<vmem>>, vector<32x128xf32>,
    %c0_10 = arith.constant 0 : index
    %c0_11 = arith.constant 0 : index
    %11 = vector.load %arg9[%c0_10, %c0_11] : memref<32x128xf32, #tpu.memory_space<vmem>>, vector<32x128xf32>
    %12 = math.absf %3 : vector<32x128xf32>
    %13 = arith.subf %4, %5 : vector<128x128xf32>
    %cst_12 = arith.constant dense<0.000000e+00> : vector<32x128xf32>
    %14 = tpu.matmul %12, %13, %cst_12 {dimension_numbers = #tpu.dot_dimension_numbers<[1], [0], [0], [1], [0, 0, 1, 1], [], []>} : vector<32x128xf32>, vector<128x128xf32>, vector<32x128xf32> -> vector<32x128xf32>
    %15 = arith.addf %11, %14 : vector<32x128xf32>
    %c0_13 = arith.constant 0 : index
    %c0_14 = arith.constant 0 : index
    %16 = vector.load %arg9[%c0_13, %c0_14] : memref<32x128xf32, #tpu.memory_space<vmem>>, vector<32x128xf32>
    tpu.vector_store %arg9[%c0_13, %c0_14], %15 {strides = array<i32>} : memref<32x128xf32, #tpu.memory_space<vmem>>, vector<32x128xf32>,
    %c0_i32_15 = arith.constant 0 : i32
    %17 = arith.cmpi eq, %arg2, %c0_i32_15 : i32
    %18 = arith.extui %17 : i1 to i32
    %c0_i32_16 = arith.constant 0 : i32
    %19 = arith.cmpi ne, %18, %c0_i32_16 : i32
    scf.if %19 {
      %c0_17 = arith.constant 0 : index
      %c0_18 = arith.constant 0 : index
      %20 = vector.load %arg8[%c0_17, %c0_18] : memref<32x128xf32, #tpu.memory_space<vmem>>, vector<32x128xf32>
      %c0_19 = arith.constant 0 : index
      %c0_20 = arith.constant 0 : index
      %21 = vector.load %arg9[%c0_19, %c0_20] : memref<32x128xf32, #tpu.memory_space<vmem>>, vector<32x128xf32>
      %22 = arith.addf %20, %21 : vector<32x128xf32>
      %cst_21 = arith.constant 5.000000e-01 : f32
      %23 = vector.broadcast %cst_21 : f32 to vector<32x128xf32>
      %24 = arith.mulf %23, %22 : vector<32x128xf32>
      %c0_22 = arith.constant 0 : index
      %c0_23 = arith.constant 0 : index
      %25 = vector.load %arg6[%c0_22, %c0_23] : memref<32x128xf32, #tpu.memory_space<vmem>>, vector<32x128xf32>
      tpu.vector_store %arg6[%c0_22, %c0_23], %24 {strides = array<i32>} : memref<32x128xf32, #tpu.memory_space<vmem>>, vector<32x128xf32>,
      %26 = arith.subf %20, %21 : vector<32x128xf32>
      %cst_24 = arith.constant 5.000000e-01 : f32
      %27 = vector.broadcast %cst_24 : f32 to vector<32x128xf32>
      %28 = arith.mulf %27, %26 : vector<32x128xf32>
      %c0_25 = arith.constant 0 : index
      %c0_26 = arith.constant 0 : index
      %29 = vector.load %arg7[%c0_25, %c0_26] : memref<32x128xf32, #tpu.memory_space<vmem>>, vector<32x128xf32>
      tpu.vector_store %arg7[%c0_25, %c0_26], %28 {strides = array<i32>} : memref<32x128xf32, #tpu.memory_space<vmem>>, vector<32x128xf32>,
    } else {
    }
    return
  }
  func.func @transform_0(%arg0: i32, %arg1: i32, %arg2: i32) -> (i32, i32) {
    %c0_i32 = arith.constant 0 : i32
    return %arg0, %arg2 : i32, i32
  }
  func.func @transform_1(%arg0: i32, %arg1: i32, %arg2: i32) -> (i32, i32) {
    %c0_i32 = arith.constant 0 : i32
    return %arg2, %arg1 : i32, i32
  }
  func.func @transform_2(%arg0: i32, %arg1: i32, %arg2: i32) -> (i32, i32) {
    %c0_i32 = arith.constant 0 : i32
    return %arg2, %arg1 : i32, i32
  }
  func.func @transform_3(%arg0: i32, %arg1: i32, %arg2: i32) -> (i32, i32) {
    %c0_i32 = arith.constant 0 : i32
    return %arg0, %arg1 : i32, i32
  }
  func.func @transform_4(%arg0: i32, %arg1: i32, %arg2: i32) -> (i32, i32) {
    %c0_i32 = arith.constant 0 : i32
    return %arg0, %arg1 : i32, i32
  }
}

</mosaic_0001>

<llo_original>
// kernel: tpu_custom_call.1
$region0: #{tpu_custom_call.1}
  #allocation0 [shape = 'u32[]', space=smem, size = 0x4, offset = 0x4, fixed_abs, tag = 'smem constant byte address 0x4 - core index']
  #allocation1 [shape = 'u32[144,128]{1,0:T(1,128)}', space=vmem, size = 0x12000, scoped, tag = 'internal scratch']
  #allocation2 [shape = 'f32[32,128]{1,0:T(8,128)}', space=vmem, size = 0x4000, scoped, tag = 'scratch operand']
  #allocation3 [shape = 'f32[32,128]{1,0:T(8,128)}', space=vmem, size = 0x4000, scoped, tag = 'scratch operand']
  %s0 = inlined_call_operand.hbm [shape: f32[32,128], index: 0, kind: input, shape index: {}]
  %s1 = inlined_call_operand.hbm [shape: f32[128,128], index: 1, kind: input, shape index: {}]
  %s2 = inlined_call_operand.hbm [shape: f32[128,128], index: 2, kind: input, shape index: {}]
  %s3 = inlined_call_operand.hbm [shape: f32[32,128], index: 3, kind: output, shape index: {0}]
  %s4 = inlined_call_operand.hbm [shape: f32[32,128], index: 4, kind: output, shape index: {1}]
  %5 = xla_tuple %s3, %s4
  %s6 = sld [smem:[#allocation0]]
  $region50: #{tpu_custom_call.1} parent=0
    _
  %s8 = ssub.s32 1, %s6
  %s9 = scalar_select 0, %s8, %s6
  $region1: #{tpu_custom_call.1} parent=0
    #allocation4 [shape = 'u8[16384]{0}', space=vmem, size = 0x4000, scoped, tag = 'input window, operand 0, single buffered']
    #allocation5 [shape = 's32[1]{0}', space=sflag, size = 0x4, scoped, tag = 'scoped memory for tpu_custom_call.1']
    #allocation6 [shape = 's32[1]{0}', space=sflag, size = 0x4, scoped, tag = 'scoped memory for tpu_custom_call.1']
    #allocation7 [shape = 'u8[65536]{0}', space=vmem, size = 0x10000, scoped, tag = 'input window, operand 1, single buffered']
    #allocation8 [shape = 's32[1]{0}', space=sflag, size = 0x4, scoped, tag = 'scoped memory for tpu_custom_call.1']
    #allocation9 [shape = 'u8[65536]{0}', space=vmem, size = 0x10000, scoped, tag = 'input window, operand 2, single buffered']
    #allocation10 [shape = 'u8[16384]{0}', space=vmem, size = 0x4000, scoped, tag = 'output window, operand 0, single buffered']
    #allocation11 [shape = 'u8[16384]{0}', space=vmem, size = 0x4000, scoped, tag = 'output window, operand 1, single buffered']
    #allocation12 [shape = 's32[1]{0}', space=sflag, size = 0x4, scoped, tag = 'scoped memory for tpu_custom_call.1']
    %10 = vsyncpa [#allocation5], 0
    %11 = vsyncpa [#allocation8], 0
    %12 = vsyncpa [#allocation6], 0
    %13 = vsyncpa [#allocation12], 0
    // Predicated region
    $region2: #{tpu_custom_call.1} parent=1 // pred_check
      _
    $region3: #{tpu_custom_call.1} parent=1 // pred_check_branch
      %15 = sbr.rel (0) target = $region5
    $region4: #{tpu_custom_call.1} parent=1 // pred_region
      %s17 = ssub.s32 512, 512
      %18 = vsyncadd [#allocation5], %s17
      %s19 = sshll.u32 [#allocation4], 4
      %s20 = int_to_ptr.vmem [resolvable:$true] %s19
      %25 = dma.hbm_to_vmem [thread:$0]  %s0, 512, %s20, [#allocation5], 128, 128, 8
    $region5: #{tpu_custom_call.1} parent=1 // pred_fallthru
      _
    // Predicated region
    $region6: #{tpu_custom_call.1} parent=1 // pred_check
      _
    $region7: #{tpu_custom_call.1} parent=1 // pred_check_branch
      %27 = sbr.rel (0) target = $region9
    $region8: #{tpu_custom_call.1} parent=1 // pred_region
      %s29 = ssub.s32 2048, 2048
      %30 = vsyncadd [#allocation8], %s29
      %s31 = sshll.u32 [#allocation7], 4
      %s32 = int_to_ptr.vmem [resolvable:$true] %s31
      %37 = dma.hbm_to_vmem [thread:$0]  %s1, 2048, %s32, [#allocation8], 128, 128, 8
    $region9: #{tpu_custom_call.1} parent=1 // pred_fallthru
      _
    // Predicated region
    $region10: #{tpu_custom_call.1} parent=1 // pred_check
      _
    $region11: #{tpu_custom_call.1} parent=1 // pred_check_branch
      %39 = sbr.rel (0) target = $region13
    $region12: #{tpu_custom_call.1} parent=1 // pred_region
      %s41 = ssub.s32 2048, 2048
      %42 = vsyncadd [#allocation8], %s41
      %s43 = sshll.u32 [#allocation9], 4
      %s44 = int_to_ptr.vmem [resolvable:$true] %s43
      %49 = dma.hbm_to_vmem [thread:$0]  %s2, 2048, %s44, [#allocation8], 128, 128, 8
    $region13: #{tpu_custom_call.1} parent=1 // pred_fallthru
      _
    // Predicated region
    $region14: #{tpu_custom_call.1} parent=1 // pred_check
      _
    $region15: #{tpu_custom_call.1} parent=1 // pred_check_branch
      %51 = sbr.rel (0) target = $region17
    $region16: #{tpu_custom_call.1} parent=1 // pred_region
      %52 = dma.done [#allocation5], 512
    $region17: #{tpu_custom_call.1} parent=1 // pred_fallthru
      _
    // Predicated region
    $region18: #{tpu_custom_call.1} parent=1 // pred_check
      _
    $region19: #{tpu_custom_call.1} parent=1 // pred_check_branch
      %54 = sbr.rel (0) target = $region21
    $region20: #{tpu_custom_call.1} parent=1 // pred_region
      %55 = dma.done [#allocation8], 2048
    $region21: #{tpu_custom_call.1} parent=1 // pred_fallthru
      _
    // Predicated region
    $region22: #{tpu_custom_call.1} parent=1 // pred_check
      _
    $region23: #{tpu_custom_call.1} parent=1 // pred_check_branch
      %57 = sbr.rel (0) target = $region25
    $region24: #{tpu_custom_call.1} parent=1 // pred_region
      %58 = dma.done [#allocation8], 2048
    $region25: #{tpu_custom_call.1} parent=1 // pred_fallthru
      _
    %p59 = scmp.eq.s32.totalorder 0, 0
    // Predicated region
    $region26: #{tpu_custom_call.1} parent=1 // pred_check
      %p60 = pneg %p59
    $region27: #{tpu_custom_call.1} parent=1 // pred_check_branch
      %62 = sbr.rel (%p60) target = $region29
    $region28: #{tpu_custom_call.1} parent=1 // pred_region
      %63 = vst [vmem:[#allocation2] sm:$0xff] 0.0
      %64 = vst [vmem:[#allocation2 + $0x8] sm:$0xff] 0.0
      %65 = vst [vmem:[#allocation2 + $0x10] sm:$0xff] 0.0
      %66 = vst [vmem:[#allocation2 + $0x18] sm:$0xff] 0.0
      %67 = vst [vmem:[#allocation3] sm:$0xff] 0.0
      %68 = vst [vmem:[#allocation3 + $0x8] sm:$0xff] 0.0
      %69 = vst [vmem:[#allocation3 + $0x10] sm:$0xff] 0.0
      %70 = vst [vmem:[#allocation3 + $0x18] sm:$0xff] 0.0
    $region29: #{tpu_custom_call.1} parent=1 // pred_fallthru
      _
    %v71 = vld [vmem:[#allocation4] sm:$0xff]
    %v72 = vld [vmem:[#allocation4 + $0x8] sm:$0xff]
    %v73 = vld [vmem:[#allocation4 + $0x10] sm:$0xff]
    %v74 = vld [vmem:[#allocation4 + $0x18] sm:$0xff]
    %v75 = vld [vmem:[#allocation7] sm:$0xff]
    %v76 = vld [vmem:[#allocation7 + $0x8] sm:$0xff]
    %v77 = vld [vmem:[#allocation7 + $0x10] sm:$0xff]
    %v78 = vld [vmem:[#allocation7 + $0x18] sm:$0xff]
    %v79 = vld [vmem:[#allocation7 + $0x20] sm:$0xff]
    %v80 = vld [vmem:[#allocation7 + $0x28] sm:$0xff]
    %v81 = vld [vmem:[#allocation7 + $0x30] sm:$0xff]
    %v82 = vld [vmem:[#allocation7 + $0x38] sm:$0xff]
    %v83 = vld [vmem:[#allocation7 + $0x40] sm:$0xff]
    %v84 = vld [vmem:[#allocation7 + $0x48] sm:$0xff]
    %v85 = vld [vmem:[#allocation7 + $0x50] sm:$0xff]
    %v86 = vld [vmem:[#allocation7 + $0x58] sm:$0xff]
    %v87 = vld [vmem:[#allocation7 + $0x60] sm:$0xff]
    %v88 = vld [vmem:[#allocation7 + $0x68] sm:$0xff]
    %v89 = vld [vmem:[#allocation7 + $0x70] sm:$0xff]
    %v90 = vld [vmem:[#allocation7 + $0x78] sm:$0xff]
    %v91 = vld [vmem:[#allocation9] sm:$0xff]
    %v92 = vld [vmem:[#allocation9 + $0x8] sm:$0xff]
    %v93 = vld [vmem:[#allocation9 + $0x10] sm:$0xff]
    %v94 = vld [vmem:[#allocation9 + $0x18] sm:$0xff]
    %v95 = vld [vmem:[#allocation9 + $0x20] sm:$0xff]
    %v96 = vld [vmem:[#allocation9 + $0x28] sm:$0xff]
    %v97 = vld [vmem:[#allocation9 + $0x30] sm:$0xff]
    %v98 = vld [vmem:[#allocation9 + $0x38] sm:$0xff]
    %v99 = vld [vmem:[#allocation9 + $0x40] sm:$0xff]
    %v100 = vld [vmem:[#allocation9 + $0x48] sm:$0xff]
    %v101 = vld [vmem:[#allocation9 + $0x50] sm:$0xff]
    %v102 = vld [vmem:[#allocation9 + $0x58] sm:$0xff]
    %v103 = vld [vmem:[#allocation9 + $0x60] sm:$0xff]
    %v104 = vld [vmem:[#allocation9 + $0x68] sm:$0xff]
    %v105 = vld [vmem:[#allocation9 + $0x70] sm:$0xff]
    %v106 = vld [vmem:[#allocation9 + $0x78] sm:$0xff]
    %v107 = vld [vmem:[#allocation2] sm:$0xff]
    %v108 = vld [vmem:[#allocation2 + $0x8] sm:$0xff]
    %v109 = vld [vmem:[#allocation2 + $0x10] sm:$0xff]
    %v110 = vld [vmem:[#allocation2 + $0x18] sm:$0xff]
    %v111 = vadd.f32 %v75, %v91
    %v112 = vadd.f32 %v76, %v92
    %v113 = vadd.f32 %v77, %v93
    %v114 = vadd.f32 %v78, %v94
    %v115 = vadd.f32 %v79, %v95
    %v116 = vadd.f32 %v80, %v96
    %v117 = vadd.f32 %v81, %v97
    %v118 = vadd.f32 %v82, %v98
    %v119 = vadd.f32 %v83, %v99
    %v120 = vadd.f32 %v84, %v100
    %v121 = vadd.f32 %v85, %v101
    %v122 = vadd.f32 %v86, %v102
    %v123 = vadd.f32 %v87, %v103
    %v124 = vadd.f32 %v88, %v104
    %v125 = vadd.f32 %v89, %v105
    %v126 = vadd.f32 %v90, %v106
    %127 = vmatprep.subr.mxu0 0.0
    %128 = vmatpush1.msra.mxu0 %v126
    %129 = vmatprep.subr.mxu0 0.0
    %130 = vmatpush1.msra.mxu0 %v125
    %131 = vmatprep.subr.mxu0 0.0
    %132 = vmatpush1.msra.mxu0 %v124
    %133 = vmatprep.subr.mxu0 0.0
    %134 = vmatpush1.msra.mxu0 %v123
    %135 = vmatprep.subr.mxu0 0.0
    %136 = vmatpush1.msra.mxu0 %v122
    %137 = vmatprep.subr.mxu0 0.0
    %138 = vmatpush1.msra.mxu0 %v121
    %139 = vmatprep.subr.mxu0 0.0
    %140 = vmatpush1.msra.mxu0 %v120
    %141 = vmatprep.subr.mxu0 0.0
    %142 = vmatpush1.msra.mxu0 %v119
    %143 = vmatprep.subr.mxu0 0.0
    %144 = vmatpush1.msra.mxu0 %v118
    %145 = vmatprep.subr.mxu0 0.0
    %146 = vmatpush1.msra.mxu0 %v117
    %147 = vmatprep.subr.mxu0 0.0
    %148 = vmatpush1.msra.mxu0 %v116
    %149 = vmatprep.subr.mxu0 0.0
    %150 = vmatpush1.msra.mxu0 %v115
    %151 = vmatprep.subr.mxu0 0.0
    %152 = vmatpush1.msra.mxu0 %v114
    %153 = vmatprep.subr.mxu0 0.0
    %154 = vmatpush1.msra.mxu0 %v113
    %155 = vmatprep.subr.mxu0 0.0
    %156 = vmatpush1.msra.mxu0 %v112
    %157 = vmatprep.subr.mxu0 0.0
    %158 = vmatpush1.msra.mxu0 %v111
    %159 = vmatprep.subr.mxu0 0.0
    %160 = vmatpush2.msra.mxu0 0.0
    %161 = vmatprep.subr.mxu0 0.0
    %162 = vmatpush2.msra.mxu0 0.0
    %163 = vmatprep.subr.mxu0 0.0
    %164 = vmatpush2.msra.mxu0 0.0
    %165 = vmatprep.subr.mxu0 0.0
    %166 = vmatpush2.msra.mxu0 0.0
    %167 = vmatprep.subr.mxu0 0.0
    %168 = vmatpush2.msra.mxu0 0.0
    %169 = vmatprep.subr.mxu0 0.0
    %170 = vmatpush2.msra.mxu0 0.0
    %171 = vmatprep.subr.mxu0 0.0
    %172 = vmatpush2.msra.mxu0 0.0
    %173 = vmatprep.subr.mxu0 0.0
    %174 = vmatpush2.msra.mxu0 0.0
    %175 = vmatprep.subr.mxu0 0.0
    %176 = vmatpush2.msra.mxu0 0.0
    %177 = vmatprep.subr.mxu0 0.0
    %178 = vmatpush2.msra.mxu0 0.0
    %179 = vmatprep.subr.mxu0 0.0
    %180 = vmatpush2.msra.mxu0 0.0
    %181 = vmatprep.subr.mxu0 0.0
    %182 = vmatpush2.msra.mxu0 0.0
    %183 = vmatprep.subr.mxu0 0.0
    %184 = vmatpush2.msra.mxu0 0.0
    %185 = vmatprep.subr.mxu0 0.0
    %186 = vmatpush2.msra.mxu0 0.0
    %187 = vmatprep.subr.mxu0 0.0
    %188 = vmatpush2.msra.mxu0 0.0
    %189 = vmatprep.subr.mxu0 0.0
    %190 = vmatpush2.msra.mxu0 0.0
    %191 = vmatprep.mubr.f32.mxu0 0.0
    %192 = vmatmul.mubr.f32.gmra.mxu0 %v71
    %v193 = vpop.f32.mrf.mxu0
    %v194 = vadd.f32 0.0, %v193
    %v195 = vpop.f32.mrf.mxu0
    %196 = vmatprep.mubr.f32.mxu0 0.0
    %197 = vmatmul.mubr.f32.gmra.mxu0 %v72
    %v198 = vpop.f32.mrf.mxu0
    %v199 = vadd.f32 0.0, %v198
    %v200 = vpop.f32.mrf.mxu0
    %201 = vmatprep.mubr.f32.mxu0 0.0
    %202 = vmatmul.mubr.f32.gmra.mxu0 %v73
    %v203 = vpop.f32.mrf.mxu0
    %v204 = vadd.f32 0.0, %v203
    %v205 = vpop.f32.mrf.mxu0
    %206 = vmatprep.mubr.f32.mxu0 0.0
    %207 = vmatmul.mubr.f32.gmra.mxu0 %v74
    %v208 = vpop.f32.mrf.mxu0
    %v209 = vadd.f32 0.0, %v208
    %v210 = vpop.f32.mrf.mxu0
    %211 = vdwg.mxu0
    %v212 = vadd.f32 %v107, %v194
    %v213 = vadd.f32 %v108, %v199
    %v214 = vadd.f32 %v109, %v204
    %v215 = vadd.f32 %v110, %v209
    %216 = vst [vmem:[#allocation2] sm:$0xff] %v212
    %217 = vst [vmem:[#allocation2 + $0x8] sm:$0xff] %v213
    %218 = vst [vmem:[#allocation2 + $0x10] sm:$0xff] %v214
    %219 = vst [vmem:[#allocation2 + $0x18] sm:$0xff] %v215
    %v220 = vld [vmem:[#allocation3] sm:$0xff]
    %v221 = vld [vmem:[#allocation3 + $0x8] sm:$0xff]
    %v222 = vld [vmem:[#allocation3 + $0x10] sm:$0xff]
    %v223 = vld [vmem:[#allocation3 + $0x18] sm:$0xff]
    %v224 = vand.u32 2147483647, %v71
    %v225 = vand.u32 2147483647, %v72
    %v226 = vand.u32 2147483647, %v73
    %v227 = vand.u32 2147483647, %v74
    %v228 = vsub.f32 %v75, %v91
    %v229 = vsub.f32 %v76, %v92
    %v230 = vsub.f32 %v77, %v93
    %v231 = vsub.f32 %v78, %v94
    %v232 = vsub.f32 %v79, %v95
    %v233 = vsub.f32 %v80, %v96
    %v234 = vsub.f32 %v81, %v97
    %v235 = vsub.f32 %v82, %v98
    %v236 = vsub.f32 %v83, %v99
    %v237 = vsub.f32 %v84, %v100
    %v238 = vsub.f32 %v85, %v101
    %v239 = vsub.f32 %v86, %v102
    %v240 = vsub.f32 %v87, %v103
    %v241 = vsub.f32 %v88, %v104
    %v242 = vsub.f32 %v89, %v105
    %v243 = vsub.f32 %v90, %v106
    %244 = vmatprep.subr.mxu0 0.0
    %245 = vmatpush1.msra.mxu0 %v243
    %246 = vmatprep.subr.mxu0 0.0
    %247 = vmatpush1.msra.mxu0 %v242
    %248 = vmatprep.subr.mxu0 0.0
    %249 = vmatpush1.msra.mxu0 %v241
    %250 = vmatprep.subr.mxu0 0.0
    %251 = vmatpush1.msra.mxu0 %v240
    %252 = vmatprep.subr.mxu0 0.0
    %253 = vmatpush1.msra.mxu0 %v239
    %254 = vmatprep.subr.mxu0 0.0
    %255 = vmatpush1.msra.mxu0 %v238
    %256 = vmatprep.subr.mxu0 0.0
    %257 = vmatpush1.msra.mxu0 %v237
    %258 = vmatprep.subr.mxu0 0.0
    %259 = vmatpush1.msra.mxu0 %v236
    %260 = vmatprep.subr.mxu0 0.0
    %261 = vmatpush1.msra.mxu0 %v235
    %262 = vmatprep.subr.mxu0 0.0
    %263 = vmatpush1.msra.mxu0 %v234
    %264 = vmatprep.subr.mxu0 0.0
    %265 = vmatpush1.msra.mxu0 %v233
    %266 = vmatprep.subr.mxu0 0.0
    %267 = vmatpush1.msra.mxu0 %v232
    %268 = vmatprep.subr.mxu0 0.0
    %269 = vmatpush1.msra.mxu0 %v231
    %270 = vmatprep.subr.mxu0 0.0
    %271 = vmatpush1.msra.mxu0 %v230
    %272 = vmatprep.subr.mxu0 0.0
    %273 = vmatpush1.msra.mxu0 %v229
    %274 = vmatprep.subr.mxu0 0.0
    %275 = vmatpush1.msra.mxu0 %v228
    %276 = vmatprep.subr.mxu0 0.0
    %277 = vmatpush2.msra.mxu0 0.0
    %278 = vmatprep.subr.mxu0 0.0
    %279 = vmatpush2.msra.mxu0 0.0
    %280 = vmatprep.subr.mxu0 0.0
    %281 = vmatpush2.msra.mxu0 0.0
    %282 = vmatprep.subr.mxu0 0.0
    %283 = vmatpush2.msra.mxu0 0.0
    %284 = vmatprep.subr.mxu0 0.0
    %285 = vmatpush2.msra.mxu0 0.0
    %286 = vmatprep.subr.mxu0 0.0
    %287 = vmatpush2.msra.mxu0 0.0
    %288 = vmatprep.subr.mxu0 0.0
    %289 = vmatpush2.msra.mxu0 0.0
    %290 = vmatprep.subr.mxu0 0.0
    %291 = vmatpush2.msra.mxu0 0.0
    %292 = vmatprep.subr.mxu0 0.0
    %293 = vmatpush2.msra.mxu0 0.0
    %294 = vmatprep.subr.mxu0 0.0
    %295 = vmatpush2.msra.mxu0 0.0
    %296 = vmatprep.subr.mxu0 0.0
    %297 = vmatpush2.msra.mxu0 0.0
    %298 = vmatprep.subr.mxu0 0.0
    %299 = vmatpush2.msra.mxu0 0.0
    %300 = vmatprep.subr.mxu0 0.0
    %301 = vmatpush2.msra.mxu0 0.0
    %302 = vmatprep.subr.mxu0 0.0
    %303 = vmatpush2.msra.mxu0 0.0
    %304 = vmatprep.subr.mxu0 0.0
    %305 = vmatpush2.msra.mxu0 0.0
    %306 = vmatprep.subr.mxu0 0.0
    %307 = vmatpush2.msra.mxu0 0.0
    %308 = vmatprep.mubr.f32.mxu0 0.0
    %309 = vmatmul.mubr.f32.gmra.mxu0 %v224
    %v310 = vpop.f32.mrf.mxu0
    %v311 = vadd.f32 0.0, %v310
    %v312 = vpop.f32.mrf.mxu0
    %313 = vmatprep.mubr.f32.mxu0 0.0
    %314 = vmatmul.mubr.f32.gmra.mxu0 %v225
    %v315 = vpop.f32.mrf.mxu0
    %v316 = vadd.f32 0.0, %v315
    %v317 = vpop.f32.mrf.mxu0
    %318 = vmatprep.mubr.f32.mxu0 0.0
    %319 = vmatmul.mubr.f32.gmra.mxu0 %v226
    %v320 = vpop.f32.mrf.mxu0
    %v321 = vadd.f32 0.0, %v320
    %v322 = vpop.f32.mrf.mxu0
    %323 = vmatprep.mubr.f32.mxu0 0.0
    %324 = vmatmul.mubr.f32.gmra.mxu0 %v227
    %v325 = vpop.f32.mrf.mxu0
    %v326 = vadd.f32 0.0, %v325
    %v327 = vpop.f32.mrf.mxu0
    %328 = vdwg.mxu0
    %v329 = vadd.f32 %v220, %v311
    %v330 = vadd.f32 %v221, %v316
    %v331 = vadd.f32 %v222, %v321
    %v332 = vadd.f32 %v223, %v326
    %333 = vst [vmem:[#allocation3] sm:$0xff] %v329
    %334 = vst [vmem:[#allocation3 + $0x8] sm:$0xff] %v330
    %335 = vst [vmem:[#allocation3 + $0x10] sm:$0xff] %v331
    %336 = vst [vmem:[#allocation3 + $0x18] sm:$0xff] %v332
    // Predicated region
    $region30: #{tpu_custom_call.1} parent=1 // pred_check
      %p337 = pneg %p59
    $region31: #{tpu_custom_call.1} parent=1 // pred_check_branch
      %339 = sbr.rel (%p337) target = $region33
    $region32: #{tpu_custom_call.1} parent=1 // pred_region
      %v340 = vld [vmem:[#allocation2] sm:$0xff]
      %v341 = vld [vmem:[#allocation2 + $0x8] sm:$0xff]
      %v342 = vld [vmem:[#allocation2 + $0x10] sm:$0xff]
      %v343 = vld [vmem:[#allocation2 + $0x18] sm:$0xff]
      %v344 = vld [vmem:[#allocation3] sm:$0xff]
      %v345 = vld [vmem:[#allocation3 + $0x8] sm:$0xff]
      %v346 = vld [vmem:[#allocation3 + $0x10] sm:$0xff]
      %v347 = vld [vmem:[#allocation3 + $0x18] sm:$0xff]
      %v348 = vadd.f32 %v340, %v344
      %v349 = vadd.f32 %v341, %v345
      %v350 = vadd.f32 %v342, %v346
      %v351 = vadd.f32 %v343, %v347
      %v352 = vmul.f32 %v348, 0.5
      %v353 = vmul.f32 %v349, 0.5
      %v354 = vmul.f32 %v350, 0.5
      %v355 = vmul.f32 %v351, 0.5
      %356 = vst [vmem:[#allocation10] sm:$0xff] %v352
      %357 = vst [vmem:[#allocation10 + $0x8] sm:$0xff] %v353
      %358 = vst [vmem:[#allocation10 + $0x10] sm:$0xff] %v354
      %359 = vst [vmem:[#allocation10 + $0x18] sm:$0xff] %v355
      %v360 = vsub.f32 %v340, %v344
      %v361 = vsub.f32 %v341, %v345
      %v362 = vsub.f32 %v342, %v346
      %v363 = vsub.f32 %v343, %v347
      %v364 = vmul.f32 %v360, 0.5
      %v365 = vmul.f32 %v361, 0.5
      %v366 = vmul.f32 %v362, 0.5
      %v367 = vmul.f32 %v363, 0.5
      %368 = vst [vmem:[#allocation11] sm:$0xff] %v364
      %369 = vst [vmem:[#allocation11 + $0x8] sm:$0xff] %v365
      %370 = vst [vmem:[#allocation11 + $0x10] sm:$0xff] %v366
      %371 = vst [vmem:[#allocation11 + $0x18] sm:$0xff] %v367
    $region33: #{tpu_custom_call.1} parent=1 // pred_fallthru
      _
    // Predicated region
    $region34: #{tpu_custom_call.1} parent=1 // pred_check
      _
    $region35: #{tpu_custom_call.1} parent=1 // pred_check_branch
      %373 = sbr.rel (0) target = $region37
    $region36: #{tpu_custom_call.1} parent=1 // pred_region
      %s375 = ssub.s32 512, 512
      %376 = vsyncadd [#allocation6], %s375
      %s377 = sshll.u32 [#allocation10], 4
      %s378 = int_to_ptr.vmem [resolvable:$true] %s377
      %383 = dma.vmem_to_hbm [thread:$0]  %s378, 512, %s3, [#allocation6], 128, 128, 8
    $region37: #{tpu_custom_call.1} parent=1 // pred_fallthru
      _
    // Predicated region
    $region38: #{tpu_custom_call.1} parent=1 // pred_check
      _
    $region39: #{tpu_custom_call.1} parent=1 // pred_check_branch
      %385 = sbr.rel (0) target = $region41
    $region40: #{tpu_custom_call.1} parent=1 // pred_region
      %s387 = ssub.s32 512, 512
      %388 = vsyncadd [#allocation12], %s387
      %s389 = sshll.u32 [#allocation11], 4
      %s390 = int_to_ptr.vmem [resolvable:$true] %s389
      %395 = dma.vmem_to_hbm [thread:$0]  %s390, 512, %s4, [#allocation12], 128, 128, 8
    $region41: #{tpu_custom_call.1} parent=1 // pred_fallthru
      _
    // Predicated region
    $region42: #{tpu_custom_call.1} parent=1 // pred_check
      _
    $region43: #{tpu_custom_call.1} parent=1 // pred_check_branch
      %397 = sbr.rel (0) target = $region45
    $region44: #{tpu_custom_call.1} parent=1 // pred_region
      %398 = dma.done [#allocation6], 512
    $region45: #{tpu_custom_call.1} parent=1 // pred_fallthru
      _
    // Predicated region
    $region46: #{tpu_custom_call.1} parent=1 // pred_check
      _
    $region47: #{tpu_custom_call.1} parent=1 // pred_check_branch
      %400 = sbr.rel (0) target = $region49
    $region48: #{tpu_custom_call.1} parent=1 // pred_region
      %401 = dma.done [#allocation12], 512
    $region49: #{tpu_custom_call.1} parent=1 // pred_fallthru
      _
    %402 = vsyncpa [#allocation5], 1
    %403 = vsyncpa [#allocation8], 1
    %404 = vsyncpa [#allocation6], 1
    %405 = vsyncpa [#allocation12], 1

</llo_original>
